<compile_context>
chip_gen: v5e
topology: v5e:2x2
jax: 0.10.0
libtpu: 0.0.40
codegen_flags: <defaults>
</compile_context>

<pallas_src>
import functools

import jax
import jax.numpy as jnp
from jax.experimental import pallas as pl
from jax.experimental.pallas import tpu as pltpu


# ----------------------------------------------------------------------------
# helpers
# ----------------------------------------------------------------------------
def _round_up(x, m):
    return ((x + m - 1) // m) * m


def _pick_tile(dim, candidates):
    """Largest candidate that evenly divides `dim`, else the whole dim."""
    for c in candidates:
        if c <= dim and dim % c == 0:
            return c
    return dim


def _vmem_limit(nbytes):
    # Explicit scoped-VMEM budget: above the 16/32 MiB defaults when needed,
    # but always below v7x's 64 MiB physical VMEM.
    return int(min(max(nbytes + (4 << 20), 32 << 20), 48 << 20))


# ----------------------------------------------------------------------------
# non-TP path: plain tiled matmul  (M, K) @ (K, Npad) -> (M, Npad)
# ----------------------------------------------------------------------------
def _matmul_kernel(w_ref, p_ref, o_ref, acc_ref):
    @pl.when(pl.program_id(1) == 0)
    def _init():
        acc_ref[...] = jnp.zeros_like(acc_ref)

    acc_ref[...] += jnp.dot(
        w_ref[...], p_ref[...], preferred_element_type=jnp.float32
    )

    @pl.when(pl.program_id(1) == pl.num_programs(1) - 1)
    def _store():
        o_ref[...] = acc_ref[...].astype(o_ref.dtype)


def pallas_matmul(w, proj, out_dtype=None):
    """Tiled (M, K) @ (K, N) with a lane-dense (128-padded) output width."""
    M, K = w.shape
    Kp, N = proj.shape
    assert K == Kp
    out_dtype = out_dtype or w.dtype

    n_pad = _round_up(N, 128)
    if n_pad != N:
        proj = jnp.pad(proj, ((0, 0), (0, n_pad - N)))

    tm = _pick_tile(M, (512, 256, 128, 64, 32, 16, 8))
    tk = _pick_tile(K, (512, 256, 128))

    w_b = jnp.dtype(w.dtype).itemsize
    p_b = jnp.dtype(proj.dtype).itemsize
    o_b = jnp.dtype(out_dtype).itemsize
    est = (2 * (tm * tk * w_b + tk * n_pad * p_b + tm * n_pad * o_b)
           + tm * n_pad * 4)

    out = pl.pallas_call(
        _matmul_kernel,
        out_shape=jax.ShapeDtypeStruct((M, n_pad), out_dtype),
        grid_spec=pl.GridSpec(
            grid=(M // tm, K // tk),
            in_specs=[
                pl.BlockSpec((tm, tk), lambda m, k: (m, k)),
                pl.BlockSpec((tk, n_pad), lambda m, k: (k, 0)),
            ],
            out_specs=pl.BlockSpec((tm, n_pad), lambda m, k: (m, 0)),
            scratch_shapes=[pltpu.VMEM((tm, n_pad), jnp.float32)],
        ),
        compiler_params=pltpu.CompilerParams(
            dimension_semantics=("parallel", "arbitrary"),
            vmem_limit_bytes=_vmem_limit(est),
        ),
        cost_estimate=pl.CostEstimate(
            flops=2 * M * K * n_pad,
            transcendentals=0,
            bytes_accessed=M * K * w_b + K * n_pad * p_b + M * n_pad * o_b,
        ),
    )(w, proj)

    if n_pad != N:
        out = out[:, :N]
    return out


# ----------------------------------------------------------------------------
# TP-merged path
# ----------------------------------------------------------------------------
def _tp_kernel(w_ref, p_ref, o_ref, *, tp, kc, n_pad):
    # All rows of this tile belong to the same TP chunk p = program_id(0).
    # Under torch's raw row-major reshape, original row i splits into `tp`
    # consecutive sub-rows of width kc that all multiply the SAME per-chunk
    # projection, so column-slice j of the weight block @ proj writes the
    # j-th lane-dense output slab directly in final (M, P*k) order.
    for j in range(tp):
        o_ref[:, j * n_pad:(j + 1) * n_pad] = jnp.dot(
            w_ref[:, j * kc:(j + 1) * kc],
            p_ref[...],
            preferred_element_type=jnp.float32,
        ).astype(o_ref.dtype)


def pallas_tp_projection(w2d, proj, out_dtype=None):
    """TP_merged_forward on the 2-D weight matricization.

    w2d:  (M, D) weight matricization, read straight from HBM (no reshape copy)
    proj: (P, D // P, k) per-TP-chunk projection matrices
    Returns (M, P * k) matching torch's raw-reshape semantics
    (requires M % P == 0 — the standard TP case).
    """
    M, D = w2d.shape
    P, Kc, N = proj.shape
    assert D == P * Kc and M % P == 0
    out_dtype = out_dtype or w2d.dtype

    n_pad = _round_up(N, 128)
    if n_pad != N:
        proj = jnp.pad(proj, ((0, 0), (0, 0), (0, n_pad - N)))

    m_per_chunk = M // P
    tm = _pick_tile(m_per_chunk, (512, 256, 128, 64, 32, 16, 8))
    tiles_per_chunk = m_per_chunk // tm

    w_b = jnp.dtype(w2d.dtype).itemsize
    p_b = jnp.dtype(proj.dtype).itemsize
    o_b = jnp.dtype(out_dtype).itemsize
    est = 2 * (tm * D * w_b + Kc * n_pad * p_b + tm * P * n_pad * o_b)

    out = pl.pallas_call(
        functools.partial(_tp_kernel, tp=P, kc=Kc, n_pad=n_pad),
        out_shape=jax.ShapeDtypeStruct((M, P * n_pad), out_dtype),
        grid_spec=pl.GridSpec(
            grid=(P, tiles_per_chunk),
            in_specs=[
                pl.BlockSpec((tm, D),
                             lambda p, t: (p * tiles_per_chunk + t, 0)),
                pl.BlockSpec((None, Kc, n_pad), lambda p, t: (p, 0, 0)),
            ],
            out_specs=pl.BlockSpec((tm, P * n_pad),
                                   lambda p, t: (p * tiles_per_chunk + t, 0)),
        ),
        compiler_params=pltpu.CompilerParams(
            dimension_semantics=("parallel", "parallel"),
            vmem_limit_bytes=_vmem_limit(est),
        ),
        cost_estimate=pl.CostEstimate(
            flops=2 * M * D * n_pad,
            transcendentals=0,
            bytes_accessed=(M * D * w_b + P * Kc * n_pad * p_b
                            + M * P * n_pad * o_b),
        ),
    )(w2d, proj)

    if n_pad != N:
        out = out.reshape(M, P, n_pad)[:, :, :N].reshape(M, P * N)
    return out


def _tp_projection_fallback(w2d, proj, out_dtype=None):
    """Generic TP path for irregular shapes (M % P != 0 or rows not 8-aligned).

    Pays one host-side raw-reshape relayout of the weight but reuses the tiled
    matmul kernel per chunk; semantics identical to torch.
    """
    M, D = w2d.shape
    P, Kc, N = proj.shape
    w_view = w2d.reshape(P, M, Kc)                     # torch.reshape semantics
    chunks = [pallas_matmul(w_view[p], proj[p], out_dtype) for p in range(P)]
    stack = jnp.stack(chunks, axis=0)                  # (P, M, N)
    return stack.reshape(M, P * N)                     # raw row-major reshape


# ----------------------------------------------------------------------------
# module
# ----------------------------------------------------------------------------
class PreComputedWeightProjection:
    # TODO(synk): espace_args-driven precision/config plumbing, logging and
    # register_buffer are host-side framework glue with no kernel equivalent.

    def __init__(self, weight):
        self.original_weight = weight
        self.precompute_enabled = False

    def _get_projection_matrix(self, loaded_projection_matrix, scores,
                               num_components, projection_method, dtype):
        if "eigen" not in projection_method:
            raise ValueError(
                f"unsupported projection_method: {projection_method!r}")
        if projection_method == "absolute_eigen":
            sort_key = jnp.abs(scores)
        else:  # 'eigen'
            sort_key = scores
        sorted_idx = jnp.argsort(-sort_key, axis=-1)   # descending

        if loaded_projection_matrix.ndim == 3:
            self.TP_merging = True
            trunc_idx = sorted_idx[:, :num_components]                # (P, k)
            gather_idx = jnp.repeat(
                trunc_idx[:, None, :], loaded_projection_matrix.shape[1], axis=1)
            proj = jnp.take_along_axis(loaded_projection_matrix, gather_idx,
                                       axis=2)
        else:
            self.TP_merging = False
            proj = loaded_projection_matrix[:, sorted_idx[:num_components]]
        return proj.astype(dtype)

    def enable_precomputation(self, loaded_projection_matrix, scores,
                              num_components,
                              projection_method="absolute_eigen"):
        self.precompute_enabled = True
        w = self.original_weight                 # keep native dtype (no upcast)
        # Small projection matrix is cast to the weight dtype (torch casts both
        # to `self.precision`); MXU accumulates in f32 either way.
        proj = self._get_projection_matrix(
            loaded_projection_matrix, scores, num_components,
            projection_method, dtype=w.dtype)

        lead = w.shape[:-1]
        w2d = w.reshape(-1, w.shape[-1])         # torch.flatten(0, -2)

        if self.TP_merging:
            P = proj.shape[0]
            M = w2d.shape[0]
            if M % P == 0 and (M // P) % 8 == 0:
                out2d = pallas_tp_projection(w2d, proj, out_dtype=w.dtype)
            else:
                out2d = _tp_projection_fallback(w2d, proj, out_dtype=w.dtype)
            new_shape = lead + (P * proj.shape[2],)
            self.precomputed_weight_projection = out2d.reshape(new_shape)
        else:
            out2d = pallas_matmul(w2d, proj, out_dtype=w.dtype)
            self.precomputed_weight_projection = out2d.reshape(
                lead + (num_components,))
        del self.original_weight

    def forward(self, inp):
        # forward ignores the input and returns the precomputed buffer
        return self.precomputed_weight_projection

    __call__ = forward


# ----------------------------------------------------------------------------
# test
# ----------------------------------------------------------------------------
if __name__ == "__main__":
    key = jax.random.PRNGKey(0)
    k_w, k_pm3, k_s3, k_pm2, k_s2, k_x = jax.random.split(key, 6)

    # Small but lane/sublane-aligned shapes consistent with the module
    # (weight = (out_features, in_features) linear weight).
    OUT_F, IN_F = 128, 256        # M, D
    TP = 2                        # previous tensor-parallel size
    NUM_COMPONENTS = 32           # k  (exercises 128-lane padding)

    weight = jax.random.normal(k_w, (OUT_F, IN_F), dtype=jnp.float32)
    x = jax.random.normal(k_x, (2, IN_F), dtype=jnp.float32)  # ignored

    # ---------------- TP-merged path (3-D projection matrix) ----------------
    loaded_proj_3d = jax.random.normal(
        k_pm3, (TP, IN_F // TP, IN_F // TP), dtype=jnp.float32)
    scores_2d = jax.random.normal(k_s3, (TP, IN_F // TP), dtype=jnp.float32)

    mod_tp = PreComputedWeightProjection(weight)
    mod_tp.enable_precomputation(loaded_proj_3d, scores_2d, NUM_COMPONENTS)
    out_tp = jax.block_until_ready(mod_tp(x))

    # Pure-JAX reference reproducing torch's raw-reshape TP_merged_forward.
    sorted_idx = jnp.argsort(-jnp.abs(scores_2d), axis=-1)[:, :NUM_COMPONENTS]
    gidx = jnp.repeat(sorted_idx[:, None, :], loaded_proj_3d.shape[1], axis=1)
    proj_ref = jnp.take_along_axis(loaded_proj_3d, gidx, axis=2)
    mat = weight.reshape(-1, IN_F)
    resh = mat.reshape(TP, mat.shape[0], IN_F // TP)
    stack = jnp.einsum("pmk,pkn->pmn", resh, proj_ref)
    ref_tp = stack.reshape(stack.shape[1], stack.shape[0] * stack.shape[2])

    assert out_tp.shape == (OUT_F, TP * NUM_COMPONENTS), out_tp.shape
    assert jnp.allclose(out_tp, ref_tp, atol=1e-4, rtol=1e-4), \
        float(jnp.max(jnp.abs(out_tp - ref_tp)))

    # ---------------- plain matmul path (2-D projection matrix) -------------
    loaded_proj_2d = jax.random.normal(k_pm2, (IN_F, IN_F), dtype=jnp.float32)
    scores_1d = jax.random.normal(k_s2, (IN_F,), dtype=jnp.float32)

    mod_mm = PreComputedWeightProjection(weight)
    mod_mm.enable_precomputation(loaded_proj_2d, scores_1d, NUM_COMPONENTS)
    out_mm = jax.block_until_ready(mod_mm(x))

    idx = jnp.argsort(-jnp.abs(scores_1d))[:NUM_COMPONENTS]
    ref_mm = weight @ loaded_proj_2d[:, idx]
    assert out_mm.shape == (OUT_F, NUM_COMPONENTS), out_mm.shape
    assert jnp.allclose(out_mm, ref_mm, atol=1e-4, rtol=1e-4), \
        float(jnp.max(jnp.abs(out_mm - ref_mm)))

    print("KERNEL_OK")
</pallas_src>

<mosaic_0001>
module attributes {stable_mosaic.version = 11 : i64} {
  func.func @_tp_kernel(%arg0: i32, %arg1: i32, %arg2: memref<64x256xf32, #tpu.memory_space<vmem>>, %arg3: memref<1x128x128xf32, #tpu.memory_space<vmem>>, %arg4: memref<64x256xf32, #tpu.memory_space<vmem>>) attributes {dimension_semantics = [#tpu.dimension_semantics<parallel>, #tpu.dimension_semantics<parallel>], iteration_bounds = array<i64: 2, 1>, scalar_prefetch = 0 : i64, scratch_operands = 0 : i64, tpu.core_type = #tpu.core_type<tc>, window_params = [{transform_indices = @transform_0, window_bounds = array<i64: 64, 256>}, {transform_indices = @transform_1, window_bounds = array<i64: 1, 128, 128>}, {transform_indices = @transform_2, window_bounds = array<i64: 64, 256>}]} {
    %c0 = arith.constant 0 : index
    %c0_0 = arith.constant 0 : index
    %0 = vector.load %arg2[%c0, %c0_0] : memref<64x256xf32, #tpu.memory_space<vmem>>, vector<64x128xf32>
    %c0_1 = arith.constant 0 : index
    %c0_2 = arith.constant 0 : index
    %c0_3 = arith.constant 0 : index
    %1 = vector.load %arg3[%c0_1, %c0_2, %c0_3] : memref<1x128x128xf32, #tpu.memory_space<vmem>>, vector<1x128x128xf32>
    %2 = vector.shape_cast %1 : vector<1x128x128xf32> to vector<128x128xf32>
    %cst = arith.constant dense<0.000000e+00> : vector<64x128xf32>
    %3 = tpu.matmul %0, %2, %cst {dimension_numbers = #tpu.dot_dimension_numbers<[1], [0], [0], [1], [0, 0, 1, 1], [], []>} : vector<64x128xf32>, vector<128x128xf32>, vector<64x128xf32> -> vector<64x128xf32>
    %c0_4 = arith.constant 0 : index
    %c0_5 = arith.constant 0 : index
    %4 = vector.load %arg4[%c0_4, %c0_5] : memref<64x256xf32, #tpu.memory_space<vmem>>, vector<64x128xf32>
    tpu.vector_store %arg4[%c0_4, %c0_5], %3 {strides = array<i32>} : memref<64x256xf32, #tpu.memory_space<vmem>>, vector<64x128xf32>,
    %c0_6 = arith.constant 0 : index
    %c128 = arith.constant 128 : index
    %5 = vector.load %arg2[%c0_6, %c128] : memref<64x256xf32, #tpu.memory_space<vmem>>, vector<64x128xf32>
    %c0_7 = arith.constant 0 : index
    %c0_8 = arith.constant 0 : index
    %c0_9 = arith.constant 0 : index
    %6 = vector.load %arg3[%c0_7, %c0_8, %c0_9] : memref<1x128x128xf32, #tpu.memory_space<vmem>>, vector<1x128x128xf32>
    %7 = vector.shape_cast %6 : vector<1x128x128xf32> to vector<128x128xf32>
    %cst_10 = arith.constant dense<0.000000e+00> : vector<64x128xf32>
    %8 = tpu.matmul %5, %7, %cst_10 {dimension_numbers = #tpu.dot_dimension_numbers<[1], [0], [0], [1], [0, 0, 1, 1], [], []>} : vector<64x128xf32>, vector<128x128xf32>, vector<64x128xf32> -> vector<64x128xf32>
    %c0_11 = arith.constant 0 : index
    %c128_12 = arith.constant 128 : index
    %9 = vector.load %arg4[%c0_11, %c128_12] : memref<64x256xf32, #tpu.memory_space<vmem>>, vector<64x128xf32>
    tpu.vector_store %arg4[%c0_11, %c128_12], %8 {strides = array<i32>} : memref<64x256xf32, #tpu.memory_space<vmem>>, vector<64x128xf32>,
    return
  }
  func.func @transform_0(%arg0: i32, %arg1: i32) -> (i32, i32) {
    %c1_i32 = arith.constant 1 : i32
    %0 = arith.muli %arg0, %c1_i32 : i32
    %1 = arith.addi %0, %arg1 : i32
    %c0_i32 = arith.constant 0 : i32
    %c0_i32_0 = arith.constant 0 : i32
    return %1, %c0_i32 : i32, i32
  }
  func.func @transform_1(%arg0: i32, %arg1: i32) -> (i32, i32, i32) {
    %c0_i32 = arith.constant 0 : i32
    %c0_i32_0 = arith.constant 0 : i32
    %c0_i32_1 = arith.constant 0 : i32
    return %arg0, %c0_i32, %c0_i32_0 : i32, i32, i32
  }
  func.func @transform_2(%arg0: i32, %arg1: i32) -> (i32, i32) {
    %c1_i32 = arith.constant 1 : i32
    %0 = arith.muli %arg0, %c1_i32 : i32
    %1 = arith.addi %0, %arg1 : i32
    %c0_i32 = arith.constant 0 : i32
    %c0_i32_0 = arith.constant 0 : i32
    return %1, %c0_i32 : i32, i32
  }
}

</mosaic_0001>

<llo_original>
// kernel: tpu_custom_call.1
$region0: #{tpu_custom_call.1}
  #allocation0 [shape = 'u32[]', space=smem, size = 0x4, offset = 0x4, fixed_abs, tag = 'smem constant byte address 0x4 - core index']
  #allocation1 [shape = 'u32[72,128]{1,0:T(1,128)}', space=vmem, size = 0x9000, scoped, tag = 'internal scratch']
  %s0 = inlined_call_operand.hbm [shape: f32[128,256], index: 0, kind: input, shape index: {}]
  %s1 = inlined_call_operand.hbm [shape: f32[2,128,128], index: 1, kind: input, shape index: {}]
  %s2 = inlined_call_operand.hbm [shape: f32[128,256], index: 2, kind: output, shape index: {}]
  %s3 = sld [smem:[#allocation0]]
  $region49: #{tpu_custom_call.1} parent=0
    _
  %s5 = ssub.s32 1, %s3
  %s6 = scalar_select 0, %s5, %s3
  $region1: #{tpu_custom_call.1} parent=0
    #allocation2 [shape = 'u8[131072]{0}', space=vmem, size = 0x20000, scoped, tag = 'input window, operand 0']
    #allocation3 [shape = 's32[2]{0}', space=sflag, size = 0x8, scoped, tag = 'scoped memory for tpu_custom_call.1']
    #allocation4 [shape = 's32[2]{0}', space=sflag, size = 0x8, scoped, tag = 'scoped memory for tpu_custom_call.1']
    #allocation5 [shape = 'u8[131072]{0}', space=vmem, size = 0x20000, scoped, tag = 'input window, operand 1']
    #allocation6 [shape = 's32[2]{0}', space=sflag, size = 0x8, scoped, tag = 'scoped memory for tpu_custom_call.1']
    #allocation7 [shape = 'u8[131072]{0}', space=vmem, size = 0x20000, scoped, tag = 'output window, operand 0']
    %7 = vsyncpa [#allocation3], 0
    %s8 = scalar_lea.sflag [#allocation3], 1
    %9 = vsyncpa %s8, 0
    %10 = vsyncpa [#allocation6], 0
    %s11 = scalar_lea.sflag [#allocation6], 1
    %12 = vsyncpa %s11, 0
    %13 = vsyncpa [#allocation4], 0
    %s14 = scalar_lea.sflag [#allocation4], 1
    %15 = vsyncpa %s14, 0
    loop: start=0, step=1, limit=4
    $region2: #{tpu_custom_call.1} parent=1 // loop_pre_header
      _
    $region3: #{tpu_custom_call.1} parent=1 // loop_header
      %s17 = sphi 0, %s21
      %p18 = scmp.ge.s32.totalorder %s17, 4
      %s24 = sphi 0, %s36
      %s25 = sphi 0, %s32
      %s26 = sphi 0, %s24
      %s27 = sphi 0, %s25
      %s28 = sphi 0, %s26
      %s29 = sphi 0, %s27
      %s41 = sphi 0, %s43
      %s44 = sphi 0, %s41
      %s45 = sphi 0, %s44
      %s61 = sphi 0, %s45
      %s67 = sphi 0, %s69
      %s70 = sphi 0, %s67
      %s71 = sphi 0, %s70
      %s87 = sphi 0, %s71
      %s95 = sphi 0, %s97
      %s98 = sphi 0, %s95
      %s99 = sphi 0, %s98
      %s115 = sphi 0, %s99
    $region4: #{tpu_custom_call.1} parent=1 // loop_header_branch
      %20 = sbr.rel (%p18) target = $region8
    $region5: #{tpu_custom_call.1} parent=1 // loop_body
      %s22 = ssub.s32 %s17, 1
      %s23 = ssub.s32 %s17, 2
      %s30 = sadd.s32 1, %s25
      %p31 = scmp.ge.s32.totalorder %s30, 1
      %s32 = scalar_select %p31, 0, %s30
      %s33 = sadd.s32 1, %s24
      %s34 = scalar_select %p31, %s33, %s24
      %p35 = scmp.ge.s32.totalorder %s34, 2
      %s36 = scalar_select %p35, 0, %s34
      %s37 = sadd.s32 %s24, %s25
      %s38 = sadd.s32 %s36, %s32
      %s39 = ssub.s32 %s37, %s38
      %p40 = scmp.eq.s32.totalorder %s39, 0
      %s42 = sadd.s32 %s41, 1
      %s43 = scalar_select %p40, %s41, %s42
      %p46 = pneg %p40
      %p47 = scmp.eq.s32.totalorder %s17, 1
      %p48 = por %p46, %p47
      %p49 = scmp.ne.s32.totalorder %s41, %s44
      %p50 = scmp.eq.s32.totalorder %s17, 0
      %p51 = por %p49, %p50
      %p52 = scmp.ne.s32.totalorder %s41, %s44
      %p53 = scmp.eq.s32.totalorder %s22, 1
      %p54 = por %p52, %p53
      %p55 = scmp.ne.s32.totalorder %s44, %s45
      %p56 = scmp.eq.s32.totalorder %s22, 0
      %p57 = por %p55, %p56
      %p58 = scmp.ne.s32.totalorder %s44, %s45
      %p59 = scmp.eq.s32.totalorder %s23, 1
      %p60 = por %p58, %p59
      %p62 = scmp.ne.s32.totalorder %s45, %s61
      %p63 = scmp.eq.s32.totalorder %s23, 0
      %p64 = por %p62, %p63
      %s65 = ssub.s32 %s24, %s36
      %p66 = scmp.eq.s32.totalorder %s65, 0
      %s68 = sadd.s32 %s67, 1
      %s69 = scalar_select %p66, %s67, %s68
      %p72 = pneg %p66
      %p73 = scmp.eq.s32.totalorder %s17, 1
      %p74 = por %p72, %p73
      %p75 = scmp.ne.s32.totalorder %s67, %s70
      %p76 = scmp.eq.s32.totalorder %s17, 0
      %p77 = por %p75, %p76
      %p78 = scmp.ne.s32.totalorder %s67, %s70
      %p79 = scmp.eq.s32.totalorder %s22, 1
      %p80 = por %p78, %p79
      %p81 = scmp.ne.s32.totalorder %s70, %s71
      %p82 = scmp.eq.s32.totalorder %s22, 0
      %p83 = por %p81, %p82
      %p84 = scmp.ne.s32.totalorder %s70, %s71
      %p85 = scmp.eq.s32.totalorder %s23, 1
      %p86 = por %p84, %p85
      %p88 = scmp.ne.s32.totalorder %s71, %s87
      %p89 = scmp.eq.s32.totalorder %s23, 0
      %p90 = por %p88, %p89
      %s91 = sadd.s32 %s24, %s25
      %s92 = sadd.s32 %s36, %s32
      %s93 = ssub.s32 %s91, %s92
      %p94 = scmp.eq.s32.totalorder %s93, 0
      %s96 = sadd.s32 %s95, 1
      %s97 = scalar_select %p94, %s95, %s96
      %p100 = pneg %p94
      %p101 = scmp.eq.s32.totalorder %s17, 1
      %p102 = por %p100, %p101
      %p103 = scmp.ne.s32.totalorder %s95, %s98
      %p104 = scmp.eq.s32.totalorder %s17, 0
      %p105 = por %p103, %p104
      %p106 = scmp.ne.s32.totalorder %s95, %s98
      %p107 = scmp.eq.s32.totalorder %s22, 1
      %p108 = por %p106, %p107
      %p109 = scmp.ne.s32.totalorder %s98, %s99
      %p110 = scmp.eq.s32.totalorder %s22, 0
      %p111 = por %p109, %p110
      %p112 = scmp.ne.s32.totalorder %s98, %s99
      %p113 = scmp.eq.s32.totalorder %s23, 1
      %p114 = por %p112, %p113
      %p116 = scmp.ne.s32.totalorder %s99, %s115
      %p117 = scmp.eq.s32.totalorder %s23, 0
      %p118 = por %p116, %p117
      %p119 = scmp.le.s32.totalorder 1, %s17
      %p120 = scmp.lt.s32.totalorder %s17, 3
      %p121 = pnand %p119, %p120
      %p122 = pneg %p121
      // Predicated region
      $region9: #{tpu_custom_call.1} parent=5 // pred_check
        _
      $region10: #{tpu_custom_call.1} parent=5 // pred_check_branch
        %124 = sbr.rel (%p121) target = $region12
      $region11: #{tpu_custom_call.1} parent=5 // pred_region
        %s125 = ssub.s32 %s17, 1
      $region12: #{tpu_custom_call.1} parent=5 // pred_fallthru
        _
      %p126 = scmp.lt.s32.totalorder %s17, 2
      // Predicated region
      $region13: #{tpu_custom_call.1} parent=5 // pred_check
        %p127 = pneg %p126
      $region14: #{tpu_custom_call.1} parent=5 // pred_check_branch
        %129 = sbr.rel (%p127) target = $region16
      $region15: #{tpu_custom_call.1} parent=5 // pred_region
        // Predicated region
        $region17: #{tpu_custom_call.1} parent=15 // pred_check
          %p130 = pneg %p51
        $region18: #{tpu_custom_call.1} parent=15 // pred_check_branch
          %132 = sbr.rel (%p130) target = $region20
        $region19: #{tpu_custom_call.1} parent=15 // pred_region
          %s133 = sand.u32 %s41, 1
          %s134 = scalar_lea.sflag [#allocation3], %s133
          %s135 = sand.u32 %s41, 1
          %s136 = smul.addr %s135, 128
          %s137 = scalar_lea.vmem [#allocation2], %s136
          %s138 = sadd.s32 %s24, %s25
          %s139 = smul.u32 8, %s138
          %141 = vsyncadd %s134, 0
          %s142 = smul.addr %s139, 2
          %s143 = smul.addr %s142, 8
          %s144 = scalar_lea.hbm %s0, %s143
          %s145 = sshll.u32 %s144, 4
          %s146 = int_to_ptr.hbm [resolvable:$true] %s145
          %s147 = sshll.u32 %s137, 4
          %s148 = int_to_ptr.vmem [resolvable:$true] %s147
          %153 = dma.hbm_to_vmem [thread:$0]  %s146, 2048, %s148, %s134, 256, 256, 16
        $region20: #{tpu_custom_call.1} parent=15 // pred_fallthru
          _
        // Predicated region
        $region21: #{tpu_custom_call.1} parent=15 // pred_check
          %p154 = pneg %p77
        $region22: #{tpu_custom_call.1} parent=15 // pred_check_branch
          %156 = sbr.rel (%p154) target = $region24
        $region23: #{tpu_custom_call.1} parent=15 // pred_region
          %s157 = sand.u32 %s67, 1
          %s158 = scalar_lea.sflag [#allocation6], %s157
          %s159 = sand.u32 %s67, 1
          %s160 = smul.addr %s159, 128
          %s161 = scalar_lea.vmem [#allocation5], %s160
          %163 = vsyncadd %s158, 0
          %s164 = smul.addr %s24, 16
          %s165 = smul.addr %s164, 8
          %s166 = scalar_lea.hbm %s1, %s165
          %s167 = sshll.u32 %s166, 4
          %s168 = int_to_ptr.hbm [resolvable:$true] %s167
          %s169 = sshll.u32 %s161, 4
          %s170 = int_to_ptr.vmem [resolvable:$true] %s169
          %175 = dma.hbm_to_vmem [thread:$0]  %s168, 2048, %s170, %s158, 128, 128, 8
        $region24: #{tpu_custom_call.1} parent=15 // pred_fallthru
          _
      $region16: #{tpu_custom_call.1} parent=5 // pred_fallthru
        _
      %p176 = scmp.le.s32.totalorder 1, %s17
      %p177 = scmp.lt.s32.totalorder %s17, 3
      %p178 = pnand %p176, %p177
      %p179 = pneg %p178
      // Predicated region
      $region25: #{tpu_custom_call.1} parent=5 // pred_check
        _
      $region26: #{tpu_custom_call.1} parent=5 // pred_check_branch
        %181 = sbr.rel (%p178) target = $region28
      $region27: #{tpu_custom_call.1} parent=5 // pred_region
        %s182 = ssub.s32 %s17, 1
        %s183 = sand.u32 %s44, 1
        %s184 = scalar_lea.sflag [#allocation3], %s183
        %s185 = sand.u32 %s44, 1
        %s186 = smul.addr %s185, 128
        %s187 = scalar_lea.vmem [#allocation2], %s186
        // Predicated region
        $region29: #{tpu_custom_call.1} parent=27 // pred_check
          %p188 = pneg %p57
        $region30: #{tpu_custom_call.1} parent=27 // pred_check_branch
          %190 = sbr.rel (%p188) target = $region32
        $region31: #{tpu_custom_call.1} parent=27 // pred_region
          %192 = dma.done %s184, 2048
        $region32: #{tpu_custom_call.1} parent=27 // pred_fallthru
          _
        %s193 = sand.u32 %s70, 1
        %s194 = scalar_lea.sflag [#allocation6], %s193
        %s195 = sand.u32 %s70, 1
        %s196 = smul.addr %s195, 128
        %s197 = scalar_lea.vmem [#allocation5], %s196
        // Predicated region
        $region33: #{tpu_custom_call.1} parent=27 // pred_check
          %p198 = pneg %p83
        $region34: #{tpu_custom_call.1} parent=27 // pred_check_branch
          %200 = sbr.rel (%p198) target = $region36
        $region35: #{tpu_custom_call.1} parent=27 // pred_region
          %202 = dma.done %s194, 2048
        $region36: #{tpu_custom_call.1} parent=27 // pred_fallthru
          _
        %s203 = sand.u32 %s44, 1
        %s204 = scalar_lea.sflag [#allocation3], %s203
        %s205 = sand.u32 %s44, 1
        %s206 = smul.addr %s205, 128
        %s207 = scalar_lea.vmem [#allocation2], %s206
        %p208 = pneg %p57
        %p209 = pneg %p54
        %s210 = sand.u32 %s70, 1
        %s211 = scalar_lea.sflag [#allocation6], %s210
        %s212 = sand.u32 %s70, 1
        %s213 = smul.addr %s212, 128
        %s214 = scalar_lea.vmem [#allocation5], %s213
        %p215 = pneg %p83
        %p216 = pneg %p80
        %p217 = pneg %p111
        %p218 = pneg %p108
        %s219 = sand.u32 %s98, 1
        %s220 = scalar_lea.sflag [#allocation4], %s219
        %s221 = sand.u32 %s98, 1
        %s222 = smul.addr %s221, 128
        %s223 = scalar_lea.vmem [#allocation7], %s222
        %s224 = sadd.s32 %s26, %s27
        %s225 = smul.u32 8, %s224
        %s226 = sadd.s32 %s26, %s27
        %s227 = smul.u32 8, %s226
        %v228 = vld [vmem:[%s187] sm:$0xff]
        %v229 = vld [vmem:[%s187 + $0x10] sm:$0xff]
        %v230 = vld [vmem:[%s187 + $0x20] sm:$0xff]
        %v231 = vld [vmem:[%s187 + $0x30] sm:$0xff]
        %v232 = vld [vmem:[%s187 + $0x40] sm:$0xff]
        %v233 = vld [vmem:[%s187 + $0x50] sm:$0xff]
        %v234 = vld [vmem:[%s187 + $0x60] sm:$0xff]
        %v235 = vld [vmem:[%s187 + $0x70] sm:$0xff]
        %v236 = vld [vmem:[%s197] sm:$0xff]
        %v237 = vld [vmem:[%s197 + $0x8] sm:$0xff]
        %v238 = vld [vmem:[%s197 + $0x10] sm:$0xff]
        %v239 = vld [vmem:[%s197 + $0x18] sm:$0xff]
        %v240 = vld [vmem:[%s197 + $0x20] sm:$0xff]
        %v241 = vld [vmem:[%s197 + $0x28] sm:$0xff]
        %v242 = vld [vmem:[%s197 + $0x30] sm:$0xff]
        %v243 = vld [vmem:[%s197 + $0x38] sm:$0xff]
        %v244 = vld [vmem:[%s197 + $0x40] sm:$0xff]
        %v245 = vld [vmem:[%s197 + $0x48] sm:$0xff]
        %v246 = vld [vmem:[%s197 + $0x50] sm:$0xff]
        %v247 = vld [vmem:[%s197 + $0x58] sm:$0xff]
        %v248 = vld [vmem:[%s197 + $0x60] sm:$0xff]
        %v249 = vld [vmem:[%s197 + $0x68] sm:$0xff]
        %v250 = vld [vmem:[%s197 + $0x70] sm:$0xff]
        %v251 = vld [vmem:[%s197 + $0x78] sm:$0xff]
        %252 = vmatpush.msra.mxu0 %v251
        %253 = vmatpush.msra.mxu0 %v250
        %254 = vmatpush.msra.mxu0 %v249
        %255 = vmatpush.msra.mxu0 %v248
        %256 = vmatpush.msra.mxu0 %v247
        %257 = vmatpush.msra.mxu0 %v246
        %258 = vmatpush.msra.mxu0 %v245
        %259 = vmatpush.msra.mxu0 %v244
        %260 = vmatpush.msra.mxu0 %v243
        %261 = vmatpush.msra.mxu0 %v242
        %262 = vmatpush.msra.mxu0 %v241
        %263 = vmatpush.msra.mxu0 %v240
        %264 = vmatpush.msra.mxu0 %v239
        %265 = vmatpush.msra.mxu0 %v238
        %266 = vmatpush.msra.mxu0 %v237
        %267 = vmatpush.msra.mxu0 %v236
        %268 = vmatmul.f32.gmra.mxu0 %v228
        %v269 = vpop.f32.mrf.mxu0
        %v270 = vadd.f32 0.0, %v269
        %271 = vmatmul.f32.gmra.mxu0 %v229
        %v272 = vpop.f32.mrf.mxu0
        %v273 = vadd.f32 0.0, %v272
        %274 = vmatmul.f32.gmra.mxu0 %v230
        %v275 = vpop.f32.mrf.mxu0
        %v276 = vadd.f32 0.0, %v275
        %277 = vmatmul.f32.gmra.mxu0 %v231
        %v278 = vpop.f32.mrf.mxu0
        %v279 = vadd.f32 0.0, %v278
        %280 = vmatmul.f32.gmra.mxu0 %v232
        %v281 = vpop.f32.mrf.mxu0
        %v282 = vadd.f32 0.0, %v281
        %283 = vmatmul.f32.gmra.mxu0 %v233
        %v284 = vpop.f32.mrf.mxu0
        %v285 = vadd.f32 0.0, %v284
        %286 = vmatmul.f32.gmra.mxu0 %v234
        %v287 = vpop.f32.mrf.mxu0
        %v288 = vadd.f32 0.0, %v287
        %289 = vmatmul.f32.gmra.mxu0 %v235
        %v290 = vpop.f32.mrf.mxu0
        %v291 = vadd.f32 0.0, %v290
        %292 = vdwg.mxu0
        %293 = vst [vmem:[%s223] sm:$0xff] %v270
        %294 = vst [vmem:[%s223 + $0x10] sm:$0xff] %v273
        %295 = vst [vmem:[%s223 + $0x20] sm:$0xff] %v276
        %296 = vst [vmem:[%s223 + $0x30] sm:$0xff] %v279
        %297 = vst [vmem:[%s223 + $0x40] sm:$0xff] %v282
        %298 = vst [vmem:[%s223 + $0x50] sm:$0xff] %v285
        %299 = vst [vmem:[%s223 + $0x60] sm:$0xff] %v288
        %300 = vst [vmem:[%s223 + $0x70] sm:$0xff] %v291
        %v301 = vld [vmem:[%s187 + $0x8] sm:$0xff]
        %v302 = vld [vmem:[%s187 + $0x18] sm:$0xff]
        %v303 = vld [vmem:[%s187 + $0x28] sm:$0xff]
        %v304 = vld [vmem:[%s187 + $0x38] sm:$0xff]
        %v305 = vld [vmem:[%s187 + $0x48] sm:$0xff]
        %v306 = vld [vmem:[%s187 + $0x58] sm:$0xff]
        %v307 = vld [vmem:[%s187 + $0x68] sm:$0xff]
        %v308 = vld [vmem:[%s187 + $0x78] sm:$0xff]
        %v309 = vld [vmem:[%s197] sm:$0xff]
        %v310 = vld [vmem:[%s197 + $0x8] sm:$0xff]
        %v311 = vld [vmem:[%s197 + $0x10] sm:$0xff]
        %v312 = vld [vmem:[%s197 + $0x18] sm:$0xff]
        %v313 = vld [vmem:[%s197 + $0x20] sm:$0xff]
        %v314 = vld [vmem:[%s197 + $0x28] sm:$0xff]
        %v315 = vld [vmem:[%s197 + $0x30] sm:$0xff]
        %v316 = vld [vmem:[%s197 + $0x38] sm:$0xff]
        %v317 = vld [vmem:[%s197 + $0x40] sm:$0xff]
        %v318 = vld [vmem:[%s197 + $0x48] sm:$0xff]
        %v319 = vld [vmem:[%s197 + $0x50] sm:$0xff]
        %v320 = vld [vmem:[%s197 + $0x58] sm:$0xff]
        %v321 = vld [vmem:[%s197 + $0x60] sm:$0xff]
        %v322 = vld [vmem:[%s197 + $0x68] sm:$0xff]
        %v323 = vld [vmem:[%s197 + $0x70] sm:$0xff]
        %v324 = vld [vmem:[%s197 + $0x78] sm:$0xff]
        %325 = vmatpush.msra.mxu0 %v324
        %326 = vmatpush.msra.mxu0 %v323
        %327 = vmatpush.msra.mxu0 %v322
        %328 = vmatpush.msra.mxu0 %v321
        %329 = vmatpush.msra.mxu0 %v320
        %330 = vmatpush.msra.mxu0 %v319
        %331 = vmatpush.msra.mxu0 %v318
        %332 = vmatpush.msra.mxu0 %v317
        %333 = vmatpush.msra.mxu0 %v316
        %334 = vmatpush.msra.mxu0 %v315
        %335 = vmatpush.msra.mxu0 %v314
        %336 = vmatpush.msra.mxu0 %v313
        %337 = vmatpush.msra.mxu0 %v312
        %338 = vmatpush.msra.mxu0 %v311
        %339 = vmatpush.msra.mxu0 %v310
        %340 = vmatpush.msra.mxu0 %v309
        %341 = vmatmul.f32.gmra.mxu0 %v301
        %v342 = vpop.f32.mrf.mxu0
        %v343 = vadd.f32 0.0, %v342
        %344 = vmatmul.f32.gmra.mxu0 %v302
        %v345 = vpop.f32.mrf.mxu0
        %v346 = vadd.f32 0.0, %v345
        %347 = vmatmul.f32.gmra.mxu0 %v303
        %v348 = vpop.f32.mrf.mxu0
        %v349 = vadd.f32 0.0, %v348
        %350 = vmatmul.f32.gmra.mxu0 %v304
        %v351 = vpop.f32.mrf.mxu0
        %v352 = vadd.f32 0.0, %v351
        %353 = vmatmul.f32.gmra.mxu0 %v305
        %v354 = vpop.f32.mrf.mxu0
        %v355 = vadd.f32 0.0, %v354
        %356 = vmatmul.f32.gmra.mxu0 %v306
        %v357 = vpop.f32.mrf.mxu0
        %v358 = vadd.f32 0.0, %v357
        %359 = vmatmul.f32.gmra.mxu0 %v307
        %v360 = vpop.f32.mrf.mxu0
        %v361 = vadd.f32 0.0, %v360
        %362 = vmatmul.f32.gmra.mxu0 %v308
        %v363 = vpop.f32.mrf.mxu0
        %v364 = vadd.f32 0.0, %v363
        %365 = vdwg.mxu0
        %366 = vst [vmem:[%s223 + $0x8] sm:$0xff] %v343
        %367 = vst [vmem:[%s223 + $0x18] sm:$0xff] %v346
        %368 = vst [vmem:[%s223 + $0x28] sm:$0xff] %v349
        %369 = vst [vmem:[%s223 + $0x38] sm:$0xff] %v352
        %370 = vst [vmem:[%s223 + $0x48] sm:$0xff] %v355
        %371 = vst [vmem:[%s223 + $0x58] sm:$0xff] %v358
        %372 = vst [vmem:[%s223 + $0x68] sm:$0xff] %v361
        %373 = vst [vmem:[%s223 + $0x78] sm:$0xff] %v364
        %s374 = sand.u32 %s98, 1
        %s375 = scalar_lea.sflag [#allocation4], %s374
        %s376 = sand.u32 %s98, 1
        %s377 = smul.addr %s376, 128
        %s378 = scalar_lea.vmem [#allocation7], %s377
        // Predicated region
        $region37: #{tpu_custom_call.1} parent=27 // pred_check
          %p379 = pneg %p108
        $region38: #{tpu_custom_call.1} parent=27 // pred_check_branch
          %381 = sbr.rel (%p379) target = $region40
        $region39: #{tpu_custom_call.1} parent=27 // pred_region
          %s382 = sadd.s32 %s26, %s27
          %s383 = smul.u32 8, %s382
          %385 = vsyncadd %s375, 0
          %s386 = smul.addr %s383, 2
          %s387 = smul.addr %s386, 8
          %s388 = scalar_lea.hbm %s2, %s387
          %s389 = sshll.u32 %s378, 4
          %s390 = int_to_ptr.vmem [resolvable:$true] %s389
          %s391 = sshll.u32 %s388, 4
          %s392 = int_to_ptr.hbm [resolvable:$true] %s391
          %397 = dma.vmem_to_hbm [thread:$0]  %s390, 2048, %s392, %s375, 256, 256, 16
        $region40: #{tpu_custom_call.1} parent=27 // pred_fallthru
          _
      $region28: #{tpu_custom_call.1} parent=5 // pred_fallthru
        _
      %p398 = scmp.le.s32.totalorder 2, %s17
      // Predicated region
      $region41: #{tpu_custom_call.1} parent=5 // pred_check
        %p399 = pneg %p398
      $region42: #{tpu_custom_call.1} parent=5 // pred_check_branch
        %401 = sbr.rel (%p399) target = $region44
      $region43: #{tpu_custom_call.1} parent=5 // pred_region
        %s402 = ssub.s32 %s17, 2
        // Predicated region
        $region45: #{tpu_custom_call.1} parent=43 // pred_check
          %p403 = pneg %p114
        $region46: #{tpu_custom_call.1} parent=43 // pred_check_branch
          %405 = sbr.rel (%p403) target = $region48
        $region47: #{tpu_custom_call.1} parent=43 // pred_region
          %s406 = sand.u32 %s99, 1
          %s407 = scalar_lea.sflag [#allocation4], %s406
          %s408 = sand.u32 %s99, 1
          %s409 = smul.addr %s408, 128
          %s410 = scalar_lea.vmem [#allocation7], %s409
          %412 = dma.done %s407, 2048
        $region48: #{tpu_custom_call.1} parent=43 // pred_fallthru
          _
      $region44: #{tpu_custom_call.1} parent=5 // pred_fallthru
        _
    $region6: #{tpu_custom_call.1} parent=1 // loop_footer
      %s21 = sadd.s32 1, %s17
    $region7: #{tpu_custom_call.1} parent=1 // loop_footer_branch
      %16 = sbr.rel target = $region3
    $region8: #{tpu_custom_call.1} parent=1 // loop_exit
      _
    %413 = vsyncpa [#allocation3], 1
    %s414 = scalar_lea.sflag [#allocation3], 1
    %415 = vsyncpa %s414, 1
    %416 = vsyncpa [#allocation6], 1
    %s417 = scalar_lea.sflag [#allocation6], 1
    %418 = vsyncpa %s417, 1
    %419 = vsyncpa [#allocation4], 1
    %s420 = scalar_lea.sflag [#allocation4], 1
    %421 = vsyncpa %s420, 1

</llo_original>
